<compile_context>
chip_gen: v7x
topology: tpu7x:2x2x1
jax: 0.10.0
libtpu: 0.0.40
codegen_flags: <defaults>
</compile_context>

<pallas_src>
import functools

import jax
import jax.numpy as jnp
from jax import lax
from jax.experimental import pallas as pl
from jax.experimental.pallas import tpu as pltpu


def _pfld_loss_kernel(attr_ref, lgt_ref, egt_ref, ang_ref, lmk_ref, out_ref,
                      *, train_batchsize):
    b = attr_ref.shape[0]
    inv_b = 1.0 / float(b)

    # ---- angle weight: sum_j (1 - cos(angle - euler_angle_gt)) -------------
    dang = ang_ref[...].astype(jnp.float32) - egt_ref[...].astype(jnp.float32)
    weight_angle = jnp.sum(1.0 - jnp.cos(dang), axis=1, keepdims=True)  # (B,1)

    # ---- attribute weight ---------------------------------------------------
    # torch: attributes_w_n = attribute_gt[:, 1:6].float()
    # Lane mask over columns >= 1 (lane extent is 6, so no upper bound needed)
    # instead of an unaligned lane slice; masked-out lane 0 contributes 0.
    attr = attr_ref[...].astype(jnp.float32)                            # (B,6)
    lane = lax.broadcasted_iota(jnp.int32, attr.shape, 1)
    attrs = jnp.where(lane >= 1, attr, 0.0)

    col_mean = jnp.sum(attrs, axis=0, keepdims=True) * inv_b            # (1,6)
    pos = col_mean > 0.0
    safe = jnp.where(pos, col_mean, 1.0)
    # Divide on the EUP (vrcp); select handles the "else train_batchsize" case.
    mat_ratio = jnp.where(pos, pl.reciprocal(safe, approx=True),
                          float(train_batchsize))                      # (1,6)
    # Zeroed lane 0 of `attrs` makes its contribution exactly 0, matching the
    # torch [:, 1:6] slice.
    weight_attribute = jnp.sum(attrs * mat_ratio, axis=1, keepdims=True)  # (B,1)

    # ---- landmark L2 (keep on VPU + XLU; no MXU at this size) ---------------
    d = lgt_ref[...].astype(jnp.float32) - lmk_ref[...].astype(jnp.float32)
    l2_distant = jnp.sum(d * d, axis=1, keepdims=True)                  # (B,1)

    # ---- fused epilogue: one sublane reduce, two SMEM element writes --------
    weighted = weight_angle * weight_attribute * l2_distant             # (B,1)
    stacked = jnp.concatenate([weighted, l2_distant], axis=1)           # (B,2)
    sums = jnp.sum(stacked, axis=0, keepdims=True) * inv_b              # (1,2)
    out_ref[0] = sums[0, 0]
    out_ref[1] = sums[0, 1]


def pfld_loss_pallas(attribute_gt, landmark_gt, euler_angle_gt, angle,
                     landmarks, train_batchsize):
    """Returns (loss, l2_mean), matching PFLDLoss.forward."""
    vmem = pl.BlockSpec(memory_space=pltpu.MemorySpace.VMEM)
    smem = pl.BlockSpec(memory_space=pltpu.MemorySpace.SMEM)

    kernel = functools.partial(_pfld_loss_kernel,
                               train_batchsize=float(train_batchsize))

    out = pl.pallas_call(
        kernel,
        out_shape=jax.ShapeDtypeStruct((2,), jnp.float32),
        in_specs=[vmem, vmem, vmem, vmem, vmem],
        out_specs=smem,
    )(attribute_gt, landmark_gt, euler_angle_gt, angle, landmarks)
    return out[0], out[1]


def pfld_loss_reference(attribute_gt, landmark_gt, euler_angle_gt, angle,
                        landmarks, train_batchsize):
    """Pure-JAX reference matching the PyTorch forward exactly."""
    weight_angle = jnp.sum(1.0 - jnp.cos(angle - euler_angle_gt), axis=1)
    attributes_w_n = attribute_gt[:, 1:6].astype(jnp.float32)
    mat_ratio = jnp.mean(attributes_w_n, axis=0)
    pos = mat_ratio > 0
    mat_ratio = jnp.where(pos, 1.0 / jnp.where(pos, mat_ratio, 1.0),
                          float(train_batchsize))
    weight_attribute = jnp.sum(attributes_w_n * mat_ratio, axis=1)
    l2_distant = jnp.sum((landmark_gt - landmarks) ** 2, axis=1)
    return (jnp.mean(weight_angle * weight_attribute * l2_distant),
            jnp.mean(l2_distant))


if __name__ == "__main__":
    # Small shapes consistent with PFLD: batch=8, 6 attributes, 3 euler
    # angles, 98 landmarks x 2 = 196 coordinates.
    B, N_ATTR, N_ANGLE, N_LMK = 8, 6, 3, 196
    train_batchsize = B

    key = jax.random.PRNGKey(0)
    k1, k2, k3, k4, k5 = jax.random.split(key, 5)

    # attribute_gt kept in its native integer dtype; the kernel widens it.
    attribute_gt = jax.random.bernoulli(k1, 0.5, (B, N_ATTR)).astype(jnp.int32)
    # Force one attribute column to all-zero to exercise the
    # "else train_batchsize" branch of the ratio computation.
    attribute_gt = attribute_gt.at[:, 3].set(0)
    landmark_gt = jax.random.normal(k2, (B, N_LMK), jnp.float32)
    landmarks = landmark_gt + 0.05 * jax.random.normal(k3, (B, N_LMK), jnp.float32)
    euler_angle_gt = 0.3 * jax.random.normal(k4, (B, N_ANGLE), jnp.float32)
    angle = euler_angle_gt + 0.1 * jax.random.normal(k5, (B, N_ANGLE), jnp.float32)

    loss, l2_mean = pfld_loss_pallas(attribute_gt, landmark_gt, euler_angle_gt,
                                     angle, landmarks, train_batchsize)
    loss, l2_mean = jax.block_until_ready((loss, l2_mean))

    loss_ref, l2_ref = pfld_loss_reference(attribute_gt, landmark_gt,
                                           euler_angle_gt, angle, landmarks,
                                           train_batchsize)
    # Slightly relaxed rtol on the weighted loss to absorb the approx
    # reciprocal (rel. error ~6e-5) used for mat_ratio.
    assert jnp.allclose(loss, loss_ref, rtol=1e-3, atol=1e-4), \
        (float(loss), float(loss_ref))
    assert jnp.allclose(l2_mean, l2_ref, rtol=1e-4, atol=1e-4), \
        (float(l2_mean), float(l2_ref))

    print("KERNEL_OK")
</pallas_src>

<mosaic_0001>
module attributes {stable_mosaic.version = 11 : i64} {
  func.func @_pfld_loss_kernel(%arg0: memref<8x6xi32, #tpu.memory_space<vmem>>, %arg1: memref<8x196xf32, #tpu.memory_space<vmem>>, %arg2: memref<8x3xf32, #tpu.memory_space<vmem>>, %arg3: memref<8x3xf32, #tpu.memory_space<vmem>>, %arg4: memref<8x196xf32, #tpu.memory_space<vmem>>, %arg5: memref<2xf32, #tpu.memory_space<smem>>) attributes {dimension_semantics = [], scalar_prefetch = 0 : i64, scratch_operands = 0 : i64, tpu.core_type = #tpu.core_type<tc>} {
    %c0 = arith.constant 0 : index
    %c0_0 = arith.constant 0 : index
    %0 = vector.load %arg3[%c0, %c0_0] : memref<8x3xf32, #tpu.memory_space<vmem>>, vector<8x3xf32>
    %c0_1 = arith.constant 0 : index
    %c0_2 = arith.constant 0 : index
    %1 = vector.load %arg2[%c0_1, %c0_2] : memref<8x3xf32, #tpu.memory_space<vmem>>, vector<8x3xf32>
    %2 = arith.subf %0, %1 : vector<8x3xf32>
    %3 = math.cos %2 : vector<8x3xf32>
    %cst = arith.constant 1.000000e+00 : f32
    %4 = vector.broadcast %cst : f32 to vector<8x3xf32>
    %5 = arith.subf %4, %3 : vector<8x3xf32>
    %cst_3 = arith.constant dense<0.000000e+00> : vector<8xf32>
    %6 = vector.multi_reduction <add>, %5, %cst_3 [1] : vector<8x3xf32> to vector<8xf32>
    %7 = vector.shape_cast %6 : vector<8xf32> to vector<8x1xf32>
    %c0_4 = arith.constant 0 : index
    %c0_5 = arith.constant 0 : index
    %8 = vector.load %arg0[%c0_4, %c0_5] : memref<8x6xi32, #tpu.memory_space<vmem>>, vector<8x6xi32>
    %9 = arith.sitofp %8 : vector<8x6xi32> to vector<8x6xf32>
    %10 = tpu.iota {dimensions = array<i32: 1>} : vector<8x6xi32>
    %c1_i32 = arith.constant 1 : i32
    %11 = vector.broadcast %c1_i32 : i32 to vector<8x6xi32>
    %12 = arith.cmpi sge, %10, %11 : vector<8x6xi32>
    %cst_6 = arith.constant 0.000000e+00 : f32
    %13 = vector.broadcast %cst_6 : f32 to vector<8x6xf32>
    %14 = arith.select %12, %9, %13 : vector<8x6xi1>, vector<8x6xf32>
    %cst_7 = arith.constant dense<0.000000e+00> : vector<6xf32>
    %15 = vector.multi_reduction <add>, %14, %cst_7 [0] : vector<8x6xf32> to vector<6xf32>
    %16 = vector.shape_cast %15 : vector<6xf32> to vector<1x6xf32>
    %cst_8 = arith.constant 1.250000e-01 : f32
    %17 = vector.broadcast %cst_8 : f32 to vector<1x6xf32>
    %18 = arith.mulf %16, %17 : vector<1x6xf32>
    %cst_9 = arith.constant 0.000000e+00 : f32
    %19 = vector.broadcast %cst_9 : f32 to vector<1x6xf32>
    %20 = arith.cmpf ogt, %18, %19 : vector<1x6xf32>
    %cst_10 = arith.constant 1.000000e+00 : f32
    %21 = vector.broadcast %cst_10 : f32 to vector<1x6xf32>
    %22 = arith.select %20, %18, %21 : vector<1x6xi1>, vector<1x6xf32>
    %23 = tpu.reciprocal %22 {approx = true} : vector<1x6xf32> -> vector<1x6xf32>
    %cst_11 = arith.constant 8.000000e+00 : f32
    %24 = vector.broadcast %cst_11 : f32 to vector<1x6xf32>
    %25 = arith.select %20, %23, %24 : vector<1x6xi1>, vector<1x6xf32>
    %26 = vector.broadcast %25 : vector<1x6xf32> to vector<8x6xf32>
    %27 = arith.mulf %14, %26 : vector<8x6xf32>
    %cst_12 = arith.constant dense<0.000000e+00> : vector<8xf32>
    %28 = vector.multi_reduction <add>, %27, %cst_12 [1] : vector<8x6xf32> to vector<8xf32>
    %29 = vector.shape_cast %28 : vector<8xf32> to vector<8x1xf32>
    %c0_13 = arith.constant 0 : index
    %c0_14 = arith.constant 0 : index
    %30 = vector.load %arg1[%c0_13, %c0_14] : memref<8x196xf32, #tpu.memory_space<vmem>>, vector<8x196xf32>
    %c0_15 = arith.constant 0 : index
    %c0_16 = arith.constant 0 : index
    %31 = vector.load %arg4[%c0_15, %c0_16] : memref<8x196xf32, #tpu.memory_space<vmem>>, vector<8x196xf32>
    %32 = arith.subf %30, %31 : vector<8x196xf32>
    %33 = arith.mulf %32, %32 : vector<8x196xf32>
    %cst_17 = arith.constant dense<0.000000e+00> : vector<8xf32>
    %34 = vector.multi_reduction <add>, %33, %cst_17 [1] : vector<8x196xf32> to vector<8xf32>
    %35 = vector.shape_cast %34 : vector<8xf32> to vector<8x1xf32>
    %36 = arith.mulf %7, %29 : vector<8x1xf32>
    %37 = arith.mulf %36, %35 : vector<8x1xf32>
    %38 = tpu.concatenate %37, %35 in 1 : vector<8x1xf32>, vector<8x1xf32> -> vector<8x2xf32>
    %cst_18 = arith.constant dense<0.000000e+00> : vector<2xf32>
    %39 = vector.multi_reduction <add>, %38, %cst_18 [0] : vector<8x2xf32> to vector<2xf32>
    %40 = vector.shape_cast %39 : vector<2xf32> to vector<1x2xf32>
    %cst_19 = arith.constant 1.250000e-01 : f32
    %41 = vector.broadcast %cst_19 : f32 to vector<1x2xf32>
    %42 = arith.mulf %40, %41 : vector<1x2xf32>
    %43 = vector.extract_strided_slice %42 {offsets = [0, 0], sizes = [1, 1], strides = [1, 1]} : vector<1x2xf32> to vector<1x1xf32>
    %44 = vector.extract %43[0, 0] : f32 from vector<1x1xf32>
    %c0_20 = arith.constant 0 : index
    %45 = memref.load %arg5[%c0_20] : memref<2xf32, #tpu.memory_space<smem>>
    memref.store %44, %arg5[%c0_20] : memref<2xf32, #tpu.memory_space<smem>>
    %46 = vector.extract_strided_slice %42 {offsets = [0, 1], sizes = [1, 1], strides = [1, 1]} : vector<1x2xf32> to vector<1x1xf32>
    %47 = vector.extract %46[0, 0] : f32 from vector<1x1xf32>
    %c1 = arith.constant 1 : index
    %48 = memref.load %arg5[%c1] : memref<2xf32, #tpu.memory_space<smem>>
    memref.store %47, %arg5[%c1] : memref<2xf32, #tpu.memory_space<smem>>
    return
  }
}

</mosaic_0001>

<llo_original>
// kernel: tpu_custom_call.1
$region0: #{tpu_custom_call.1}
  #allocation0 [shape = 'u32[]', space=smem, size = 0x4, offset = 0x4, fixed_abs, tag = 'smem constant byte address 0x4 - core index']
  #allocation1 [shape = 'u32[144,128]{1,0:T(1,128)}', space=vmem, size = 0x12000, scoped, tag = 'internal scratch']
  %s0 = inlined_call_operand.hbm [shape: s32[8,6], index: 0, kind: input, shape index: {}]
  %s1 = inlined_call_operand.vmem [shape: f32[8,196], index: 1, kind: input, shape index: {}]
  %s2 = inlined_call_operand.vmem [shape: f32[8,3], index: 2, kind: input, shape index: {}]
  %s3 = inlined_call_operand.vmem [shape: f32[8,3], index: 3, kind: input, shape index: {}]
  %s4 = inlined_call_operand.vmem [shape: f32[8,196], index: 4, kind: input, shape index: {}]
  %s5 = inlined_call_operand.hbm [shape: f32[2], index: 5, kind: output, shape index: {}]
  %s6 = sld [smem:[#allocation0]]
  $region34: #{tpu_custom_call.1} parent=0
    _
  %s8 = ssub.s32 1, %s6
  %s9 = scalar_select 0, %s8, %s6
  $region1: #{tpu_custom_call.1} parent=0
    #allocation2 [shape = 'u8[4096]{0}', space=vmem, size = 0x1000, scoped, tag = 'input window, operand 0, single buffered']
    #allocation3 [shape = 's32[1]{0}', space=sflag, size = 0x4, scoped, tag = 'scoped memory for tpu_custom_call.1']
    #allocation4 [shape = 's32[1]{0}', space=sflag, size = 0x4, scoped, tag = 'scoped memory for tpu_custom_call.1']
    #allocation5 [shape = 'u8[512]{0}', space=smem, size = 0x200, scoped, tag = 'output window, operand 0, single buffered']
    %10 = vsyncpa [#allocation3], 0
    %11 = vsyncpa [#allocation4], 0
    // Predicated region
    $region2: #{tpu_custom_call.1} parent=1 // pred_check
      _
    $region3: #{tpu_custom_call.1} parent=1 // pred_check_branch
      %13 = sbr.rel (0) target = $region5
    $region4: #{tpu_custom_call.1} parent=1 // pred_region
      %s15 = ssub.s32 128, 128
      %16 = vsyncadd [#allocation3], %s15
      %s18 = sshll.u32 [#allocation2], 4
      %s19 = int_to_ptr.vmem [resolvable:$true] %s18
      %21 = dma.hbm_to_vmem [thread:$0]  %s0, 128, %s19, [#allocation3]
    $region5: #{tpu_custom_call.1} parent=1 // pred_fallthru
      _
    // Predicated region
    $region6: #{tpu_custom_call.1} parent=1 // pred_check
      _
    $region7: #{tpu_custom_call.1} parent=1 // pred_check_branch
      %23 = sbr.rel (0) target = $region9
    $region8: #{tpu_custom_call.1} parent=1 // pred_region
      _
    $region9: #{tpu_custom_call.1} parent=1 // pred_fallthru
      _
    // Predicated region
    $region10: #{tpu_custom_call.1} parent=1 // pred_check
      _
    $region11: #{tpu_custom_call.1} parent=1 // pred_check_branch
      %25 = sbr.rel (0) target = $region13
    $region12: #{tpu_custom_call.1} parent=1 // pred_region
      _
    $region13: #{tpu_custom_call.1} parent=1 // pred_fallthru
      _
    // Predicated region
    $region14: #{tpu_custom_call.1} parent=1 // pred_check
      _
    $region15: #{tpu_custom_call.1} parent=1 // pred_check_branch
      %27 = sbr.rel (0) target = $region17
    $region16: #{tpu_custom_call.1} parent=1 // pred_region
      _
    $region17: #{tpu_custom_call.1} parent=1 // pred_fallthru
      _
    // Predicated region
    $region18: #{tpu_custom_call.1} parent=1 // pred_check
      _
    $region19: #{tpu_custom_call.1} parent=1 // pred_check_branch
      %29 = sbr.rel (0) target = $region21
    $region20: #{tpu_custom_call.1} parent=1 // pred_region
      _
    $region21: #{tpu_custom_call.1} parent=1 // pred_fallthru
      _
    // Predicated region
    $region22: #{tpu_custom_call.1} parent=1 // pred_check
      _
    $region23: #{tpu_custom_call.1} parent=1 // pred_check_branch
      %31 = sbr.rel (0) target = $region25
    $region24: #{tpu_custom_call.1} parent=1 // pred_region
      %32 = dma.done [#allocation3], 128
    $region25: #{tpu_custom_call.1} parent=1 // pred_fallthru
      _
    %v33 = vld [vmem:[%s3] sm:$0xff]
    %v34 = vld [vmem:[%s2] sm:$0xff]
    %v35 = vsub.f32 %v33, %v34
    %v36 = vand.u32 2147483647, %v35
    %vm37 = vcmp.le.f32.partialorder %v36, 0.7853982
    %vm38 = vcmp.lt.s32.totalorder %v35, 0
    %v39 = vand.u32 %v35, 2139095040
    %v40 = vshrl.u32 %v39, 23
    %v41 = vsub.s32 %v40, 127
    %v42 = vand.u32 2147483647, %v35
    %v43 = vand.u32 %v42, 8388607
    %v44 = vor.u32 %v43, 8388608
    %v45 = vsub.s32 0, %v44
    %v46 = vadd.s32 %v41, 1
    %vm47 = vcmp.gt.s32.totalorder %v46, 0
    %v48 = vsel %vm47, %v46, 0
    %v49 = vshrl.u32 %v48, 5
    %v50 = vand.u32 %v48, 31
    %v51 = vsub.s32 32, %v50
    %v52 = vshrl.u32 683565275, %v51
    %v53 = vshll.u32 683565275, %v50
    %v54 = vshrl.u32 2475754826, %v51
    %v55 = vor.u32 %v53, %v54
    %v56 = vshll.u32 2475754826, %v50
    %v57 = vshrl.u32 2131351028, %v51
    %v58 = vor.u32 %v56, %v57
    %v59 = vshll.u32 2131351028, %v50
    %v60 = vshrl.u32 2102212464, %v51
    %v61 = vor.u32 %v59, %v60
    %v62 = vshll.u32 2102212464, %v50
    %v63 = vshrl.u32 920167782, %v51
    %v64 = vor.u32 %v62, %v63
    %v65 = vshll.u32 920167782, %v50
    %v66 = vshrl.u32 1326507024, %v51
    %v67 = vor.u32 %v65, %v66
    %vm68 = vcmp.lt.s32.totalorder %v49, 1
    %vm69 = vcmp.lt.s32.totalorder %v49, 2
    %vm70 = vcmp.lt.s32.totalorder %v49, 3
    %vm71 = vcmp.lt.s32.totalorder %v49, 4
    %v72 = vsel %vm68, %v52, %v55
    %v73 = vsel %vm71, %v61, 2102212464
    %v74 = vsel %vm70, %v58, %v73
    %v75 = vsel %vm69, %v72, %v74
    %v76 = vsel %vm68, %v55, %v58
    %v77 = vsel %vm71, %v64, 920167782
    %v78 = vsel %vm70, %v61, %v77
    %v79 = vsel %vm69, %v76, %v78
    %v80 = vsel %vm68, %v58, %v61
    %v81 = vsel %vm71, %v67, 1326507024
    %v82 = vsel %vm70, %v64, %v81
    %v83 = vsel %vm69, %v80, %v82
    %v84 = vshll.u32 %v44, 8
    %v85 = vmul.u32.u64.compose %v84, %v83
    %v86 = vextract.low.u32 %v85
    %v87 = vextract.high.u32 %v85
    %v88 = vmul.u32.u64.compose %v84, %v79
    %v89 = vextract.low.u32 %v88
    %v90 = vextract.high.u32 %v88
    %v91 = vmul.u32 %v84, %v75
    %v92 = vadd.s32 %v87, %v89
    %vm93 = vc.u32 %v87, %v89
    %v94 = vadd.s32 %v90, 1
    %v95 = vsel %vm93, %v94, %v90
    %v96 = vadd.s32 %v91, %v95
    %v97 = vadd.s32 %v96, 536870912
    %v98 = vshrl.u32 %v97, 30
    %v99 = vshll.u32 %v98, 30
    %v100 = vsub.s32 %v96, %v99
    %vm101 = vcmp.lt.s32.totalorder %v100, 0
    %v102 = vsub.s32 0, %v100
    %v103 = vsel %vm101, %v102, %v100
    %v104 = vclz %v103
    %v105 = vsub.s32 %v104, 2
    %vm106 = vcmp.gt.s32.totalorder 0, %v105
    %v107 = vsel %vm106, 0, %v105
    %v108 = vsub.s32 32, %v107
    %v109 = vshll.u32 %v100, %v107
    %v110 = vshrl.u32 %v92, %v108
    %v111 = vor.u32 %v109, %v110
    %v112 = vsub.s32 4294967266, %v107
    %v113 = vadd.s32 %v112, 127
    %v114 = vshll.u32 %v113, 23
    %v115 = vor.u32 4788187, %v114
    %v116 = vand.u32 2147483647, %v115
    %v118 = vcvt.s32.f32 %v111
    %v119 = vmul.f32 %v118, %v116
    %v120 = vxor.u32 %v119, 2147483648
    %v121 = vsel %vm38, %v120, %v119
    %v122 = vsub.s32 4, %v98
    %v123 = vsel %vm38, %v122, %v98
    %v124 = vsel %vm37, %v35, %v121
    %v125 = vsel %vm37, 0, %v123
    %v126 = vcosq.f32.pop %v124
    %v127 = vsinq.f32.pop %v124
    %vm128 = vweird.f32 %v35
    %v129 = vand.u32 %v125, 3
    %vm130 = vcmp.lt.s32.totalorder %v129, 2
    %vm131 = vcmp.eq.s32.totalorder %v129, 0
    %v132 = vxor.u32 %v127, 2147483648
    %v133 = vsel %vm131, %v126, %v132
    %vm134 = vcmp.eq.s32.totalorder %v129, 2
    %v135 = vxor.u32 %v126, 2147483648
    %v136 = vsel %vm134, %v135, %v127
    %v137 = vsel %vm130, %v133, %v136
    %v138 = vsel %vm128, nan, %v137
    %v139 = vsub.f32 1.0, %v138
    %vm140 = vcmask 23552
    %v141 = vsel %vm140, %v139, 0.0
    %142 = vadd.xlane.f32.xlu0 %v141
    %v143 = vpop.xlane.xlu0 %142
    %v144 = vld [vmem:[#allocation2] sm:$0xff]
    %v145 = vcvt.s32.f32 %v144
    %v146 = vlaneseq
    %v147 = vand.u32 %v146, 127
    %vm148 = vcmp.ge.s32.totalorder %v147, 1
    %v149 = vsel %vm148, %v145, 0.0
    %vm150 = vcmask 48128
    %v151 = vsel %vm150, %v149, 0.0
    %v152 = vrot.slane %v151, 4
    %v153 = vadd.f32 %v151, %v152
    %v154 = vrot.slane %v153, 2
    %v155 = vadd.f32 %v153, %v154
    %v156 = vrot.slane %v155, 1
    %v157 = vadd.f32 %v155, %v156
    %v158 = vmul.f32 %v157, 0.125
    %vm159 = vcmp.gt.f32.partialorder %v158, 0.0
    %v160 = vsel %vm159, %v158, 1.0
    %v161 = vrcp.pop %v160
    %v162 = vsel %vm159, %v161, 8.0
    %v163 = vmul.f32 %v149, %v162
    %v164 = vsel %vm150, %v163, 0.0
    %165 = vadd.xlane.f32.xlu0 %v164
    %v166 = vpop.xlane.xlu0 %165
    %v167 = vld [vmem:[%s1] sm:$0xff]
    %v168 = vld [vmem:[%s1 + $0x8] sm:$0xff]
    %v169 = vld [vmem:[%s4] sm:$0xff]
    %v170 = vld [vmem:[%s4 + $0x8] sm:$0xff]
    %v171 = vsub.f32 %v167, %v169
    %v172 = vsub.f32 %v168, %v170
    %v173 = vmul.f32 %v171, %v171
    %v174 = vmul.f32 %v172, %v172
    %vm175 = vcmask 556032
    %v176 = vsel %vm175, %v174, 0.0
    %v177 = vadd.f32 %v173, %v176
    %178 = vadd.xlane.f32.xlu0 %v177
    %v179 = vpop.xlane.xlu0 %178
    %v180 = vmul.f32 %v143, %v166
    %v181 = vmul.f32 %v180, %v179
    %vm182 = vcmask 7168
    %v183 = vsel %vm182, %v181, %v179
    %vm184 = vcmask 15360
    %v185 = vsel %vm184, %v183, 0.0
    %v186 = vrot.slane %v185, 4
    %v187 = vadd.f32 %v185, %v186
    %v188 = vrot.slane %v187, 2
    %v189 = vadd.f32 %v187, %v188
    %v190 = vrot.slane %v189, 1
    %v191 = vadd.f32 %v189, %v190
    %v192 = vmul.f32 %v191, 0.125
    %s193 = vtos %v192
    %s194 = scalar_lea.smem [#allocation5], 0
    %195 = sst [smem:[%s194]] %s193
    %196 = vrot.lane.b32.xlu0 %v192, 127
    %v197 = vpop.permute.xlu0 %196
    %s198 = vtos %v197
    %s199 = scalar_lea.smem [#allocation5], 1
    %200 = sst [smem:[%s199]] %s198
    // Predicated region
    $region26: #{tpu_custom_call.1} parent=1 // pred_check
      _
    $region27: #{tpu_custom_call.1} parent=1 // pred_check_branch
      %202 = sbr.rel (0) target = $region29
    $region28: #{tpu_custom_call.1} parent=1 // pred_region
      %s204 = ssub.s32 16, 16
      %205 = vsyncadd [#allocation4], %s204
      %208 = dma.smem_to_hbm [#allocation5], 16, %s5, [#allocation4]
    $region29: #{tpu_custom_call.1} parent=1 // pred_fallthru
      _
    // Predicated region
    $region30: #{tpu_custom_call.1} parent=1 // pred_check
      _
    $region31: #{tpu_custom_call.1} parent=1 // pred_check_branch
      %210 = sbr.rel (0) target = $region33
    $region32: #{tpu_custom_call.1} parent=1 // pred_region
      %211 = dma.done [#allocation4], 16
    $region33: #{tpu_custom_call.1} parent=1 // pred_fallthru
      _
    %212 = sfence
    %213 = vsyncpa [#allocation3], 1
    %214 = vsyncpa [#allocation4], 1

</llo_original>
